<compile_context>
chip_gen: v5e
topology: v5e:2x2
jax: 0.10.0
libtpu: 0.0.40
codegen_flags: <defaults>
</compile_context>

<pallas_src>
import jax
import jax.numpy as jnp
from jax import lax
from jax.experimental import pallas as pl
from jax.experimental.pallas import tpu as pltpu

EMBED_DIM = 32
BATCH = 8
TEMP = 0.5          # self.ssl_temp
SSL_REG = 0.5       # self.ssl_reg
LRELU_SLOPE = 0.2   # nn.LeakyReLU(0.2)
BN_EPS = 1e-5
OUT_LANES = 128     # lane-dense output slab width


# ------------------------------- kernel -------------------------------------


def _lrelu(x):
    return jnp.where(x > 0, x, LRELU_SLOPE * x)


def bgcl_kernel(x_ref, sge_ref, w_ref, vec_ref, out_ref):
    """Fused BGCL forward (eval).

    x_ref   : (BATCH, 2D)   = [u_embed | s_embed]
    sge_ref : (4*BATCH, D)  = [u_sge1 ; u_sge2 ; s_sge1 ; s_sge2]
    w_ref   : (6D, 2D)      = [blockdiag(W_u1',W_s1') ; blockdiag(W_u2,W_s2) ;
                               W_us1' zero-padded to 2D output cols]
    vec_ref : (8, 2D)       rows: b1_blk, b2_blk, bus1_pad, wus2_row_pad,
                                  [bus2, 0, ...]
    out_ref : (BATCH, 128)  lane-dense slab: col 0 = scores, [0,1] = ssl_loss
    """
    D = EMBED_DIM
    D2 = 2 * D
    B = BATCH

    x_in = x_ref[...]                                   # (B, 2D)

    # static, sublane-aligned views into the packed slabs
    w1 = w_ref[0:D2, :]                                 # (2D, 2D)
    w2 = w_ref[D2:2 * D2, :]                            # (2D, 2D)
    wus1 = w_ref[2 * D2:3 * D2, :]                      # (2D, 2D), cols D: = 0

    b1 = vec_ref[0:1, :]
    b2 = vec_ref[1:2, :]
    bus1 = vec_ref[2:3, :]
    wus2_row = vec_ref[3:4, :]
    bus2 = vec_ref[4:5, 0:1]                            # (1, 1)

    # layer1 (+folded BN) + LeakyReLU; dropout = identity in eval mode
    h = _lrelu(jnp.dot(x_in, w1, preferred_element_type=jnp.float32) + b1)
    # layer2 for both branches (block-diagonal) -> h == [x_u | x_i]
    h = jnp.dot(h, w2, preferred_element_type=jnp.float32) + b2
    # us_layer1 (+folded BN) on cat([x_u, x_i]) + LeakyReLU
    h = _lrelu(jnp.dot(h, wus1, preferred_element_type=jnp.float32) + bus1)
    # us_layer2 (D -> 1): VPU multiply + lane reduce instead of an N=1 matmul
    scores = jnp.sum(h * wus2_row, axis=1, keepdims=True) + bus2    # (B, 1)

    # ------------------------- SSL (InfoNCE) loss ---------------------------
    inv_t = jnp.float32(1.0 / TEMP)

    def info_nce(a, b):
        na = a / jnp.maximum(
            jnp.sqrt(jnp.sum(a * a, axis=1, keepdims=True)), 1e-12)
        nb = b / jnp.maximum(
            jnp.sqrt(jnp.sum(b * b, axis=1, keepdims=True)), 1e-12)
        s = lax.dot_general(na, nb, (((1,), (1,)), ((), ())),
                            preferred_element_type=jnp.float32) * inv_t  # (B,B)
        r = lax.broadcasted_iota(jnp.int32, s.shape, 0)
        c = lax.broadcasted_iota(jnp.int32, s.shape, 1)
        pos = jnp.sum(jnp.where(r == c, s, 0.0), axis=1, keepdims=True)  # diag
        lse = jnp.log(jnp.sum(jnp.exp(s), axis=1, keepdims=True))
        per_row = pos - lse               # == log(exp(pos/T) / sum(exp(s/T)))
        return -jnp.sum(per_row, axis=0, keepdims=True)                  # (1,1)

    u1 = sge_ref[0:B, :]
    u2 = sge_ref[B:2 * B, :]
    s1 = sge_ref[2 * B:3 * B, :]
    s2 = sge_ref[3 * B:4 * B, :]
    ssl = SSL_REG * (info_nce(u1, u2) + info_nce(s1, s2))                # (1,1)

    # lane-dense output: a single unmasked (8, 128) store
    lane = lax.broadcasted_iota(jnp.int32, (B, OUT_LANES), 1)
    row = lax.broadcasted_iota(jnp.int32, (B, OUT_LANES), 0)
    slab = jnp.where(lane == 0, scores, 0.0)
    slab = jnp.where((lane == 1) & (row == 0), ssl, slab)
    out_ref[...] = slab


# ------------------------------- wrapper -------------------------------------


@jax.jit
def bgcl_forward(nodes_u_embed, nodes_s_embed,
                 nodes_u_sge_1, nodes_u_sge_2,
                 nodes_s_sge_1, nodes_s_sge_2,
                 w_slab, vec_slab):
    x_in = jnp.concatenate([nodes_u_embed, nodes_s_embed], axis=1)   # (B, 2D)
    sge = jnp.concatenate([nodes_u_sge_1, nodes_u_sge_2,
                           nodes_s_sge_1, nodes_s_sge_2], axis=0)    # (4B, D)
    vmem = pl.BlockSpec(memory_space=pltpu.MemorySpace.VMEM)
    out = pl.pallas_call(
        bgcl_kernel,
        out_shape=jax.ShapeDtypeStruct((BATCH, OUT_LANES), jnp.float32),
        in_specs=[vmem] * 4,
        out_specs=vmem,
    )(x_in, sge, w_slab, vec_slab)
    return out[:, 0], out[0, 1]          # scores.squeeze(), ssl_loss


# -------------------- parameter init / host-side packing ---------------------


def _linear_init(key, din, dout):
    kw, kb = jax.random.split(key)
    bound = 1.0 / jnp.sqrt(jnp.float32(din))
    w = jax.random.uniform(kw, (dout, din), jnp.float32, -bound, bound)
    b = jax.random.uniform(kb, (dout,), jnp.float32, -bound, bound)
    return w, b


def _bn_init(key, d):
    k1, k2, k3, k4 = jax.random.split(key, 4)
    gamma = 1.0 + 0.1 * jax.random.normal(k1, (d,), jnp.float32)
    beta = 0.1 * jax.random.normal(k2, (d,), jnp.float32)
    rmean = 0.1 * jax.random.normal(k3, (d,), jnp.float32)
    rvar = 1.0 + 0.1 * jax.random.uniform(k4, (d,), jnp.float32)
    return gamma, beta, rmean, rvar


def make_raw_params(key, dim):
    keys = jax.random.split(key, 9)
    p = {}
    p["wu1"], p["bu1"] = _linear_init(keys[0], dim, dim)
    p["wu2"], p["bu2"] = _linear_init(keys[1], dim, dim)
    p["ws1"], p["bs1"] = _linear_init(keys[2], dim, dim)
    p["ws2"], p["bs2"] = _linear_init(keys[3], dim, dim)
    p["wus1"], p["bus1"] = _linear_init(keys[4], 2 * dim, dim)
    p["wus2"], p["bus2"] = _linear_init(keys[5], dim, 1)
    p["gu"], p["beu"], p["rmu"], p["rvu"] = _bn_init(keys[6], dim)
    p["gs"], p["bes"], p["rms"], p["rvs"] = _bn_init(keys[7], dim)
    p["gus"], p["beus"], p["rmus"], p["rvus"] = _bn_init(keys[8], dim)
    return p


def pack_params(p, dim):
    """Fold eval-mode BN into the preceding Linear and pack into two slabs."""
    def fold(w, b, g, beta, m, v):
        scale = g / jnp.sqrt(v + BN_EPS)          # per output feature
        return w * scale[:, None], (b - m) * scale + beta

    wu1, bu1 = fold(p["wu1"], p["bu1"], p["gu"], p["beu"], p["rmu"], p["rvu"])
    ws1, bs1 = fold(p["ws1"], p["bs1"], p["gs"], p["bes"], p["rms"], p["rvs"])
    wus1, bus1 = fold(p["wus1"], p["bus1"],
                      p["gus"], p["beus"], p["rmus"], p["rvus"])

    z = jnp.zeros((dim, dim), jnp.float32)
    w1_blk = jnp.block([[wu1.T, z], [z, ws1.T]])            # (2D, 2D)
    w2_blk = jnp.block([[p["wu2"].T, z], [z, p["ws2"].T]])  # (2D, 2D)
    wus1_pad = jnp.pad(wus1.T, ((0, 0), (0, dim)))          # (2D, 2D)
    w_slab = jnp.concatenate([w1_blk, w2_blk, wus1_pad], axis=0)  # (6D, 2D)

    d2 = 2 * dim
    vec = jnp.zeros((8, d2), jnp.float32)
    vec = vec.at[0].set(jnp.concatenate([bu1, bs1]))
    vec = vec.at[1].set(jnp.concatenate([p["bu2"], p["bs2"]]))
    vec = vec.at[2, :dim].set(bus1)
    vec = vec.at[3, :dim].set(p["wus2"][0])
    vec = vec.at[4, 0].set(p["bus2"][0])
    return w_slab, vec


# --------------------------- pure-JAX reference ------------------------------


def reference_forward(p, u_emb, s_emb, u1, u2, s1, s2):
    def bn(x, g, b, m, v):
        return (x - m) / jnp.sqrt(v + BN_EPS) * g + b

    def lrelu(x):
        return jnp.where(x > 0, x, LRELU_SLOPE * x)

    x_u = lrelu(bn(u_emb @ p["wu1"].T + p["bu1"],
                   p["gu"], p["beu"], p["rmu"], p["rvu"]))
    x_u = x_u @ p["wu2"].T + p["bu2"]
    x_i = lrelu(bn(s_emb @ p["ws1"].T + p["bs1"],
                   p["gs"], p["bes"], p["rms"], p["rvs"]))
    x_i = x_i @ p["ws2"].T + p["bs2"]
    x = jnp.concatenate([x_u, x_i], axis=1)
    x = lrelu(bn(x @ p["wus1"].T + p["bus1"],
                 p["gus"], p["beus"], p["rmus"], p["rvus"]))
    scores = (x @ p["wus2"].T + p["bus2"])[:, 0]

    def nce(a, b):
        na = a / jnp.maximum(jnp.linalg.norm(a, axis=1, keepdims=True), 1e-12)
        nb = b / jnp.maximum(jnp.linalg.norm(b, axis=1, keepdims=True), 1e-12)
        pos = jnp.exp(jnp.sum(na * nb, axis=1) / TEMP)
        ttl = jnp.sum(jnp.exp(na @ nb.T / TEMP), axis=1)
        return -jnp.sum(jnp.log(pos / ttl))

    ssl = SSL_REG * (nce(u1, u2) + nce(s1, s2))
    return scores, ssl


# ---------------------------------- main -------------------------------------


if __name__ == "__main__":
    key = jax.random.PRNGKey(0)
    k_par, k_emb, k_u, k_s = jax.random.split(key, 4)

    num_users, num_items = 20, 30
    raw = make_raw_params(k_par, EMBED_DIM)
    w_slab, vec_slab = pack_params(raw, EMBED_DIM)

    ks = jax.random.split(k_emb, 6)
    u_tab = jax.random.normal(ks[0], (num_users, EMBED_DIM), jnp.float32)
    u_sge1_tab = jax.random.normal(ks[1], (num_users, EMBED_DIM), jnp.float32)
    u_sge2_tab = jax.random.normal(ks[2], (num_users, EMBED_DIM), jnp.float32)
    s_tab = jax.random.normal(ks[3], (num_items, EMBED_DIM), jnp.float32)
    s_sge1_tab = jax.random.normal(ks[4], (num_items, EMBED_DIM), jnp.float32)
    s_sge2_tab = jax.random.normal(ks[5], (num_items, EMBED_DIM), jnp.float32)

    nodes_u = jax.random.randint(k_u, (BATCH,), 0, num_users)
    nodes_s = jax.random.randint(k_s, (BATCH,), 0, num_items)

    # glue: synthetic u_embed / s_embed modules (table lookups) in plain JAX
    nodes_u_embed = u_tab[nodes_u]
    nodes_u_sge_1 = u_sge1_tab[nodes_u]
    nodes_u_sge_2 = u_sge2_tab[nodes_u]
    nodes_s_embed = s_tab[nodes_s]
    nodes_s_sge_1 = s_sge1_tab[nodes_s]
    nodes_s_sge_2 = s_sge2_tab[nodes_s]

    scores, ssl_loss = bgcl_forward(
        nodes_u_embed, nodes_s_embed,
        nodes_u_sge_1, nodes_u_sge_2,
        nodes_s_sge_1, nodes_s_sge_2,
        w_slab, vec_slab)
    jax.block_until_ready((scores, ssl_loss))

    ref_scores, ref_ssl = reference_forward(
        raw, nodes_u_embed, nodes_s_embed,
        nodes_u_sge_1, nodes_u_sge_2, nodes_s_sge_1, nodes_s_sge_2)

    assert scores.shape == (BATCH,)
    assert ssl_loss.shape == ()
    assert bool(jnp.all(jnp.isfinite(scores))) and bool(jnp.isfinite(ssl_loss))
    assert bool(jnp.allclose(scores, ref_scores, rtol=1e-3, atol=1e-3))
    assert bool(jnp.allclose(ssl_loss, ref_ssl, rtol=1e-3, atol=1e-3))
    print("KERNEL_OK")
</pallas_src>

<mosaic_0001>
module attributes {stable_mosaic.version = 11 : i64} {
  func.func @bgcl_kernel(%arg0: memref<8x64xf32, #tpu.memory_space<vmem>>, %arg1: memref<32x32xf32, #tpu.memory_space<vmem>>, %arg2: memref<192x64xf32, #tpu.memory_space<vmem>>, %arg3: memref<8x64xf32, #tpu.memory_space<vmem>>, %arg4: memref<8x128xf32, #tpu.memory_space<vmem>>) attributes {dimension_semantics = [], scalar_prefetch = 0 : i64, scratch_operands = 0 : i64, tpu.core_type = #tpu.core_type<tc>} {
    %c0 = arith.constant 0 : index
    %c0_0 = arith.constant 0 : index
    %0 = vector.load %arg0[%c0, %c0_0] : memref<8x64xf32, #tpu.memory_space<vmem>>, vector<8x64xf32>
    %c0_1 = arith.constant 0 : index
    %c0_2 = arith.constant 0 : index
    %1 = vector.load %arg2[%c0_1, %c0_2] : memref<192x64xf32, #tpu.memory_space<vmem>>, vector<64x64xf32>
    %c64 = arith.constant 64 : index
    %c0_3 = arith.constant 0 : index
    %2 = vector.load %arg2[%c64, %c0_3] : memref<192x64xf32, #tpu.memory_space<vmem>>, vector<64x64xf32>
    %c128 = arith.constant 128 : index
    %c0_4 = arith.constant 0 : index
    %3 = vector.load %arg2[%c128, %c0_4] : memref<192x64xf32, #tpu.memory_space<vmem>>, vector<64x64xf32>
    %c0_5 = arith.constant 0 : index
    %c0_6 = arith.constant 0 : index
    %4 = vector.load %arg3[%c0_5, %c0_6] : memref<8x64xf32, #tpu.memory_space<vmem>>, vector<1x64xf32>
    %c1 = arith.constant 1 : index
    %c0_7 = arith.constant 0 : index
    %5 = vector.load %arg3[%c1, %c0_7] : memref<8x64xf32, #tpu.memory_space<vmem>>, vector<1x64xf32>
    %c2 = arith.constant 2 : index
    %c0_8 = arith.constant 0 : index
    %6 = vector.load %arg3[%c2, %c0_8] : memref<8x64xf32, #tpu.memory_space<vmem>>, vector<1x64xf32>
    %c3 = arith.constant 3 : index
    %c0_9 = arith.constant 0 : index
    %7 = vector.load %arg3[%c3, %c0_9] : memref<8x64xf32, #tpu.memory_space<vmem>>, vector<1x64xf32>
    %c4 = arith.constant 4 : index
    %c0_10 = arith.constant 0 : index
    %8 = vector.load %arg3[%c4, %c0_10] : memref<8x64xf32, #tpu.memory_space<vmem>>, vector<1x1xf32>
    %cst = arith.constant dense<0.000000e+00> : vector<8x64xf32>
    %9 = tpu.matmul %0, %1, %cst {dimension_numbers = #tpu.dot_dimension_numbers<[1], [0], [0], [1], [0, 0, 1, 1], [], []>} : vector<8x64xf32>, vector<64x64xf32>, vector<8x64xf32> -> vector<8x64xf32>
    %10 = vector.broadcast %4 : vector<1x64xf32> to vector<8x64xf32>
    %11 = arith.addf %9, %10 : vector<8x64xf32>
    %cst_11 = arith.constant 0.000000e+00 : f32
    %12 = vector.broadcast %cst_11 : f32 to vector<8x64xf32>
    %13 = arith.cmpf ogt, %11, %12 : vector<8x64xf32>
    %cst_12 = arith.constant 2.000000e-01 : f32
    %14 = vector.broadcast %cst_12 : f32 to vector<8x64xf32>
    %15 = arith.mulf %14, %11 : vector<8x64xf32>
    %16 = arith.select %13, %11, %15 : vector<8x64xi1>, vector<8x64xf32>
    %cst_13 = arith.constant dense<0.000000e+00> : vector<8x64xf32>
    %17 = tpu.matmul %16, %2, %cst_13 {dimension_numbers = #tpu.dot_dimension_numbers<[1], [0], [0], [1], [0, 0, 1, 1], [], []>} : vector<8x64xf32>, vector<64x64xf32>, vector<8x64xf32> -> vector<8x64xf32>
    %18 = vector.broadcast %5 : vector<1x64xf32> to vector<8x64xf32>
    %19 = arith.addf %17, %18 : vector<8x64xf32>
    %cst_14 = arith.constant dense<0.000000e+00> : vector<8x64xf32>
    %20 = tpu.matmul %19, %3, %cst_14 {dimension_numbers = #tpu.dot_dimension_numbers<[1], [0], [0], [1], [0, 0, 1, 1], [], []>} : vector<8x64xf32>, vector<64x64xf32>, vector<8x64xf32> -> vector<8x64xf32>
    %21 = vector.broadcast %6 : vector<1x64xf32> to vector<8x64xf32>
    %22 = arith.addf %20, %21 : vector<8x64xf32>
    %cst_15 = arith.constant 0.000000e+00 : f32
    %23 = vector.broadcast %cst_15 : f32 to vector<8x64xf32>
    %24 = arith.cmpf ogt, %22, %23 : vector<8x64xf32>
    %cst_16 = arith.constant 2.000000e-01 : f32
    %25 = vector.broadcast %cst_16 : f32 to vector<8x64xf32>
    %26 = arith.mulf %25, %22 : vector<8x64xf32>
    %27 = arith.select %24, %22, %26 : vector<8x64xi1>, vector<8x64xf32>
    %28 = vector.broadcast %7 : vector<1x64xf32> to vector<8x64xf32>
    %29 = arith.mulf %27, %28 : vector<8x64xf32>
    %cst_17 = arith.constant dense<0.000000e+00> : vector<8xf32>
    %30 = vector.multi_reduction <add>, %29, %cst_17 [1] : vector<8x64xf32> to vector<8xf32>
    %31 = vector.shape_cast %30 : vector<8xf32> to vector<8x1xf32>
    %32 = vector.broadcast %8 : vector<1x1xf32> to vector<8x1xf32>
    %33 = arith.addf %31, %32 : vector<8x1xf32>
    %c0_18 = arith.constant 0 : index
    %c0_19 = arith.constant 0 : index
    %34 = vector.load %arg1[%c0_18, %c0_19] : memref<32x32xf32, #tpu.memory_space<vmem>>, vector<8x32xf32>
    %c8 = arith.constant 8 : index
    %c0_20 = arith.constant 0 : index
    %35 = vector.load %arg1[%c8, %c0_20] : memref<32x32xf32, #tpu.memory_space<vmem>>, vector<8x32xf32>
    %c16 = arith.constant 16 : index
    %c0_21 = arith.constant 0 : index
    %36 = vector.load %arg1[%c16, %c0_21] : memref<32x32xf32, #tpu.memory_space<vmem>>, vector<8x32xf32>
    %c24 = arith.constant 24 : index
    %c0_22 = arith.constant 0 : index
    %37 = vector.load %arg1[%c24, %c0_22] : memref<32x32xf32, #tpu.memory_space<vmem>>, vector<8x32xf32>
    %38 = arith.mulf %34, %34 : vector<8x32xf32>
    %cst_23 = arith.constant dense<0.000000e+00> : vector<8xf32>
    %39 = vector.multi_reduction <add>, %38, %cst_23 [1] : vector<8x32xf32> to vector<8xf32>
    %40 = vector.shape_cast %39 : vector<8xf32> to vector<8x1xf32>
    %41 = math.sqrt %40 : vector<8x1xf32>
    %cst_24 = arith.constant 9.99999996E-13 : f32
    %42 = vector.broadcast %cst_24 : f32 to vector<8x1xf32>
    %43 = arith.maximumf %41, %42 : vector<8x1xf32>
    %44 = vector.broadcast %43 : vector<8x1xf32> to vector<8x32xf32>
    %45 = arith.divf %34, %44 : vector<8x32xf32>
    %46 = arith.mulf %35, %35 : vector<8x32xf32>
    %cst_25 = arith.constant dense<0.000000e+00> : vector<8xf32>
    %47 = vector.multi_reduction <add>, %46, %cst_25 [1] : vector<8x32xf32> to vector<8xf32>
    %48 = vector.shape_cast %47 : vector<8xf32> to vector<8x1xf32>
    %49 = math.sqrt %48 : vector<8x1xf32>
    %cst_26 = arith.constant 9.99999996E-13 : f32
    %50 = vector.broadcast %cst_26 : f32 to vector<8x1xf32>
    %51 = arith.maximumf %49, %50 : vector<8x1xf32>
    %52 = vector.broadcast %51 : vector<8x1xf32> to vector<8x32xf32>
    %53 = arith.divf %35, %52 : vector<8x32xf32>
    %cst_27 = arith.constant dense<0.000000e+00> : vector<8x8xf32>
    %54 = tpu.matmul %45, %53, %cst_27 {dimension_numbers = #tpu.dot_dimension_numbers<[1], [1], [0], [0], [0, 0, 1, 0], [], []>} : vector<8x32xf32>, vector<8x32xf32>, vector<8x8xf32> -> vector<8x8xf32>
    %cst_28 = arith.constant 2.000000e+00 : f32
    %55 = vector.broadcast %cst_28 : f32 to vector<8x8xf32>
    %56 = arith.mulf %54, %55 : vector<8x8xf32>
    %57 = tpu.iota {dimensions = array<i32: 0>} : vector<8x8xi32>
    %58 = tpu.iota {dimensions = array<i32: 1>} : vector<8x8xi32>
    %59 = arith.cmpi eq, %57, %58 : vector<8x8xi32>
    %cst_29 = arith.constant 0.000000e+00 : f32
    %60 = vector.broadcast %cst_29 : f32 to vector<8x8xf32>
    %61 = arith.select %59, %56, %60 : vector<8x8xi1>, vector<8x8xf32>
    %cst_30 = arith.constant dense<0.000000e+00> : vector<8xf32>
    %62 = vector.multi_reduction <add>, %61, %cst_30 [1] : vector<8x8xf32> to vector<8xf32>
    %63 = vector.shape_cast %62 : vector<8xf32> to vector<8x1xf32>
    %64 = math.exp %56 : vector<8x8xf32>
    %cst_31 = arith.constant dense<0.000000e+00> : vector<8xf32>
    %65 = vector.multi_reduction <add>, %64, %cst_31 [1] : vector<8x8xf32> to vector<8xf32>
    %66 = vector.shape_cast %65 : vector<8xf32> to vector<8x1xf32>
    %67 = math.log %66 : vector<8x1xf32>
    %68 = arith.subf %63, %67 : vector<8x1xf32>
    %cst_32 = arith.constant dense<0.000000e+00> : vector<1xf32>
    %69 = vector.multi_reduction <add>, %68, %cst_32 [0] : vector<8x1xf32> to vector<1xf32>
    %70 = vector.shape_cast %69 : vector<1xf32> to vector<1x1xf32>
    %cst_33 = arith.constant 0.000000e+00 : f32
    %71 = vector.broadcast %cst_33 : f32 to vector<1x1xf32>
    %72 = arith.subf %71, %70 : vector<1x1xf32>
    %73 = arith.mulf %36, %36 : vector<8x32xf32>
    %cst_34 = arith.constant dense<0.000000e+00> : vector<8xf32>
    %74 = vector.multi_reduction <add>, %73, %cst_34 [1] : vector<8x32xf32> to vector<8xf32>
    %75 = vector.shape_cast %74 : vector<8xf32> to vector<8x1xf32>
    %76 = math.sqrt %75 : vector<8x1xf32>
    %cst_35 = arith.constant 9.99999996E-13 : f32
    %77 = vector.broadcast %cst_35 : f32 to vector<8x1xf32>
    %78 = arith.maximumf %76, %77 : vector<8x1xf32>
    %79 = vector.broadcast %78 : vector<8x1xf32> to vector<8x32xf32>
    %80 = arith.divf %36, %79 : vector<8x32xf32>
    %81 = arith.mulf %37, %37 : vector<8x32xf32>
    %cst_36 = arith.constant dense<0.000000e+00> : vector<8xf32>
    %82 = vector.multi_reduction <add>, %81, %cst_36 [1] : vector<8x32xf32> to vector<8xf32>
    %83 = vector.shape_cast %82 : vector<8xf32> to vector<8x1xf32>
    %84 = math.sqrt %83 : vector<8x1xf32>
    %cst_37 = arith.constant 9.99999996E-13 : f32
    %85 = vector.broadcast %cst_37 : f32 to vector<8x1xf32>
    %86 = arith.maximumf %84, %85 : vector<8x1xf32>
    %87 = vector.broadcast %86 : vector<8x1xf32> to vector<8x32xf32>
    %88 = arith.divf %37, %87 : vector<8x32xf32>
    %cst_38 = arith.constant dense<0.000000e+00> : vector<8x8xf32>
    %89 = tpu.matmul %80, %88, %cst_38 {dimension_numbers = #tpu.dot_dimension_numbers<[1], [1], [0], [0], [0, 0, 1, 0], [], []>} : vector<8x32xf32>, vector<8x32xf32>, vector<8x8xf32> -> vector<8x8xf32>
    %cst_39 = arith.constant 2.000000e+00 : f32
    %90 = vector.broadcast %cst_39 : f32 to vector<8x8xf32>
    %91 = arith.mulf %89, %90 : vector<8x8xf32>
    %92 = tpu.iota {dimensions = array<i32: 0>} : vector<8x8xi32>
    %93 = tpu.iota {dimensions = array<i32: 1>} : vector<8x8xi32>
    %94 = arith.cmpi eq, %92, %93 : vector<8x8xi32>
    %cst_40 = arith.constant 0.000000e+00 : f32
    %95 = vector.broadcast %cst_40 : f32 to vector<8x8xf32>
    %96 = arith.select %94, %91, %95 : vector<8x8xi1>, vector<8x8xf32>
    %cst_41 = arith.constant dense<0.000000e+00> : vector<8xf32>
    %97 = vector.multi_reduction <add>, %96, %cst_41 [1] : vector<8x8xf32> to vector<8xf32>
    %98 = vector.shape_cast %97 : vector<8xf32> to vector<8x1xf32>
    %99 = math.exp %91 : vector<8x8xf32>
    %cst_42 = arith.constant dense<0.000000e+00> : vector<8xf32>
    %100 = vector.multi_reduction <add>, %99, %cst_42 [1] : vector<8x8xf32> to vector<8xf32>
    %101 = vector.shape_cast %100 : vector<8xf32> to vector<8x1xf32>
    %102 = math.log %101 : vector<8x1xf32>
    %103 = arith.subf %98, %102 : vector<8x1xf32>
    %cst_43 = arith.constant dense<0.000000e+00> : vector<1xf32>
    %104 = vector.multi_reduction <add>, %103, %cst_43 [0] : vector<8x1xf32> to vector<1xf32>
    %105 = vector.shape_cast %104 : vector<1xf32> to vector<1x1xf32>
    %cst_44 = arith.constant 0.000000e+00 : f32
    %106 = vector.broadcast %cst_44 : f32 to vector<1x1xf32>
    %107 = arith.subf %106, %105 : vector<1x1xf32>
    %108 = arith.addf %72, %107 : vector<1x1xf32>
    %cst_45 = arith.constant 5.000000e-01 : f32
    %109 = vector.broadcast %cst_45 : f32 to vector<1x1xf32>
    %110 = arith.mulf %109, %108 : vector<1x1xf32>
    %111 = tpu.iota {dimensions = array<i32: 1>} : vector<8x128xi32>
    %112 = tpu.iota {dimensions = array<i32: 0>} : vector<8x128xi32>
    %c0_i32 = arith.constant 0 : i32
    %113 = vector.broadcast %c0_i32 : i32 to vector<8x128xi32>
    %114 = arith.cmpi eq, %111, %113 : vector<8x128xi32>
    %cst_46 = arith.constant 0.000000e+00 : f32
    %115 = vector.shape_cast %33 : vector<8x1xf32> to vector<8x1xf32>
    %116 = vector.broadcast %115 : vector<8x1xf32> to vector<8x128xf32>
    %117 = vector.broadcast %cst_46 : f32 to vector<8x128xf32>
    %118 = arith.select %114, %116, %117 : vector<8x128xi1>, vector<8x128xf32>
    %c1_i32 = arith.constant 1 : i32
    %119 = vector.broadcast %c1_i32 : i32 to vector<8x128xi32>
    %120 = arith.cmpi eq, %111, %119 : vector<8x128xi32>
    %c0_i32_47 = arith.constant 0 : i32
    %121 = vector.broadcast %c0_i32_47 : i32 to vector<8x128xi32>
    %122 = arith.cmpi eq, %112, %121 : vector<8x128xi32>
    %123 = arith.andi %120, %122 : vector<8x128xi1>
    %124 = vector.shape_cast %110 : vector<1x1xf32> to vector<1x1xf32>
    %125 = vector.broadcast %124 : vector<1x1xf32> to vector<8x128xf32>
    %126 = arith.select %123, %125, %118 : vector<8x128xi1>, vector<8x128xf32>
    %c0_48 = arith.constant 0 : index
    %c0_49 = arith.constant 0 : index
    %127 = vector.load %arg4[%c0_48, %c0_49] : memref<8x128xf32, #tpu.memory_space<vmem>>, vector<8x128xf32>
    tpu.vector_store %arg4[%c0_48, %c0_49], %126 {strides = array<i32>} : memref<8x128xf32, #tpu.memory_space<vmem>>, vector<8x128xf32>,
    return
  }
}

</mosaic_0001>

<llo_original>
// kernel: bgcl_forward.1
$region0: #{bgcl_forward.1}
  #allocation0 [shape = 'u32[]', space=smem, size = 0x4, offset = 0x4, fixed_abs, tag = 'smem constant byte address 0x4 - core index']
  #allocation1 [shape = 'u32[72,128]{1,0:T(1,128)}', space=vmem, size = 0x9000, scoped, tag = 'internal scratch']
  %s0 = inlined_call_operand.vmem [shape: f32[8,64], index: 0, kind: input, shape index: {}]
  %s1 = inlined_call_operand.vmem [shape: f32[32,32], index: 1, kind: input, shape index: {}]
  %s2 = inlined_call_operand.vmem [shape: f32[192,64], index: 2, kind: input, shape index: {}]
  %s3 = inlined_call_operand.vmem [shape: f32[8,64], index: 3, kind: input, shape index: {}]
  %s4 = inlined_call_operand.vmem [shape: f32[8,128], index: 4, kind: output, shape index: {}]
  %s5 = sld [smem:[#allocation0]]
  $region26: #{bgcl_forward.1} parent=0
    _
  %s7 = ssub.s32 1, %s5
  %s8 = scalar_select 0, %s7, %s5
  // Predicated region
  $region2: #{bgcl_forward.1} parent=0 // pred_check
    _
  $region3: #{bgcl_forward.1} parent=0 // pred_check_branch
    %10 = sbr.rel (0) target = $region5
  $region4: #{bgcl_forward.1} parent=0 // pred_region
    _
  $region5: #{bgcl_forward.1} parent=0 // pred_fallthru
    _
  // Predicated region
  $region6: #{bgcl_forward.1} parent=0 // pred_check
    _
  $region7: #{bgcl_forward.1} parent=0 // pred_check_branch
    %12 = sbr.rel (0) target = $region9
  $region8: #{bgcl_forward.1} parent=0 // pred_region
    _
  $region9: #{bgcl_forward.1} parent=0 // pred_fallthru
    _
  // Predicated region
  $region10: #{bgcl_forward.1} parent=0 // pred_check
    _
  $region11: #{bgcl_forward.1} parent=0 // pred_check_branch
    %14 = sbr.rel (0) target = $region13
  $region12: #{bgcl_forward.1} parent=0 // pred_region
    _
  $region13: #{bgcl_forward.1} parent=0 // pred_fallthru
    _
  // Predicated region
  $region14: #{bgcl_forward.1} parent=0 // pred_check
    _
  $region15: #{bgcl_forward.1} parent=0 // pred_check_branch
    %16 = sbr.rel (0) target = $region17
  $region16: #{bgcl_forward.1} parent=0 // pred_region
    _
  $region17: #{bgcl_forward.1} parent=0 // pred_fallthru
    _
  %v17 = vld [vmem:[%s0] sm:$0xff]
  %v18 = vld [vmem:[%s2] sm:$0xff]
  %v19 = vld [vmem:[%s2 + $0x8] sm:$0xff]
  %v20 = vld [vmem:[%s2 + $0x10] sm:$0xff]
  %v21 = vld [vmem:[%s2 + $0x18] sm:$0xff]
  %v22 = vld [vmem:[%s2 + $0x20] sm:$0xff]
  %v23 = vld [vmem:[%s2 + $0x28] sm:$0xff]
  %v24 = vld [vmem:[%s2 + $0x30] sm:$0xff]
  %v25 = vld [vmem:[%s2 + $0x38] sm:$0xff]
  %v26 = vld [vmem:[%s2 + $0x40] sm:$0xff]
  %v27 = vld [vmem:[%s2 + $0x48] sm:$0xff]
  %v28 = vld [vmem:[%s2 + $0x50] sm:$0xff]
  %v29 = vld [vmem:[%s2 + $0x58] sm:$0xff]
  %v30 = vld [vmem:[%s2 + $0x60] sm:$0xff]
  %v31 = vld [vmem:[%s2 + $0x68] sm:$0xff]
  %v32 = vld [vmem:[%s2 + $0x70] sm:$0xff]
  %v33 = vld [vmem:[%s2 + $0x78] sm:$0xff]
  %v34 = vld [vmem:[%s2 + $0x80] sm:$0xff]
  %v35 = vld [vmem:[%s2 + $0x88] sm:$0xff]
  %v36 = vld [vmem:[%s2 + $0x90] sm:$0xff]
  %v37 = vld [vmem:[%s2 + $0x98] sm:$0xff]
  %v38 = vld [vmem:[%s2 + $0xa0] sm:$0xff]
  %v39 = vld [vmem:[%s2 + $0xa8] sm:$0xff]
  %v40 = vld [vmem:[%s2 + $0xb0] sm:$0xff]
  %v41 = vld [vmem:[%s2 + $0xb8] sm:$0xff]
  %v42 = vld [vmem:[%s3] sm:$0x1]
  %v43 = vld [vmem:[%s3 + $0x1] sm:$0x1]
  %v44 = vld [vmem:[%s3 + $0x2] sm:$0x1]
  %v45 = vld [vmem:[%s3 + $0x3] sm:$0x1]
  %v46 = vld [vmem:[%s3 + $0x4] sm:$0x1]
  %v47 = vperm.slane %v42, 0
  %vm48 = vcmask 523264
  %v50 = vsel %vm48, %v17, 0
  %52 = vmatpush.msra.mxu0 0.0
  %53 = vmatpush.msra.mxu0 0.0
  %54 = vmatpush.msra.mxu0 0.0
  %55 = vmatpush.msra.mxu0 0.0
  %56 = vmatpush.msra.mxu0 0.0
  %57 = vmatpush.msra.mxu0 0.0
  %58 = vmatpush.msra.mxu0 0.0
  %59 = vmatpush.msra.mxu0 0.0
  %60 = vmatpush.msra.mxu0 %v25
  %61 = vmatpush.msra.mxu0 %v24
  %62 = vmatpush.msra.mxu0 %v23
  %63 = vmatpush.msra.mxu0 %v22
  %64 = vmatpush.msra.mxu0 %v21
  %65 = vmatpush.msra.mxu0 %v20
  %66 = vmatpush.msra.mxu0 %v19
  %67 = vmatpush.msra.mxu0 %v18
  %68 = vmatmul.f32.gmra.mxu0 %v50
  %v69 = vpop.f32.mrf.mxu0
  %v70 = vadd.f32 %v47, %v69
  %71 = vdwg.mxu0
  %vm72 = vcmp.gt.f32.partialorder %v70, 0.0
  %v73 = vmul.f32 %v70, 0.2
  %v74 = vsel %vm72, %v70, %v73
  %v75 = vperm.slane %v43, 0
  %v77 = vsel %vm48, %v74, 0
  %79 = vmatpush.msra.mxu0 0.0
  %80 = vmatpush.msra.mxu0 0.0
  %81 = vmatpush.msra.mxu0 0.0
  %82 = vmatpush.msra.mxu0 0.0
  %83 = vmatpush.msra.mxu0 0.0
  %84 = vmatpush.msra.mxu0 0.0
  %85 = vmatpush.msra.mxu0 0.0
  %86 = vmatpush.msra.mxu0 0.0
  %87 = vmatpush.msra.mxu0 %v33
  %88 = vmatpush.msra.mxu0 %v32
  %89 = vmatpush.msra.mxu0 %v31
  %90 = vmatpush.msra.mxu0 %v30
  %91 = vmatpush.msra.mxu0 %v29
  %92 = vmatpush.msra.mxu0 %v28
  %93 = vmatpush.msra.mxu0 %v27
  %94 = vmatpush.msra.mxu0 %v26
  %95 = vmatmul.f32.gmra.mxu0 %v77
  %v96 = vpop.f32.mrf.mxu0
  %v97 = vadd.f32 %v75, %v96
  %98 = vdwg.mxu0
  %v99 = vperm.slane %v44, 0
  %v101 = vsel %vm48, %v97, 0
  %103 = vmatpush.msra.mxu0 0.0
  %104 = vmatpush.msra.mxu0 0.0
  %105 = vmatpush.msra.mxu0 0.0
  %106 = vmatpush.msra.mxu0 0.0
  %107 = vmatpush.msra.mxu0 0.0
  %108 = vmatpush.msra.mxu0 0.0
  %109 = vmatpush.msra.mxu0 0.0
  %110 = vmatpush.msra.mxu0 0.0
  %111 = vmatpush.msra.mxu0 %v41
  %112 = vmatpush.msra.mxu0 %v40
  %113 = vmatpush.msra.mxu0 %v39
  %114 = vmatpush.msra.mxu0 %v38
  %115 = vmatpush.msra.mxu0 %v37
  %116 = vmatpush.msra.mxu0 %v36
  %117 = vmatpush.msra.mxu0 %v35
  %118 = vmatpush.msra.mxu0 %v34
  %119 = vmatmul.f32.gmra.mxu0 %v101
  %v120 = vpop.f32.mrf.mxu0
  %v121 = vadd.f32 %v99, %v120
  %122 = vdwg.mxu0
  %vm123 = vcmp.gt.f32.partialorder %v121, 0.0
  %v124 = vmul.f32 %v121, 0.2
  %v125 = vsel %vm123, %v121, %v124
  %v126 = vperm.slane %v45, 0
  %v127 = vmul.f32 %v125, %v126
  %v128 = vsel %vm48, %v127, 0.0
  %129 = vadd.xlane.f32.xlu0 %v128
  %v130 = vpop.xlane.xlu0 %129
  %v131 = vperm.slane %v46, 0
  %v132 = vadd.f32 %v130, %v131
  %v133 = vld [vmem:[%s1] sm:$0xff]
  %v134 = vld [vmem:[%s1 + $0x8] sm:$0xff]
  %v135 = vld [vmem:[%s1 + $0x10] sm:$0xff]
  %v136 = vld [vmem:[%s1 + $0x18] sm:$0xff]
  %v137 = vmul.f32 %v133, %v133
  %vm138 = vcmask 261120
  %v139 = vsel %vm138, %v137, 0.0
  %140 = vadd.xlane.f32.xlu0 %v139
  %v141 = vpop.xlane.xlu0 %140
  %v142 = vrsqrt.pop %v141
  %v143 = vmul.f32 %v142, %v141
  %v144 = vmul.f32 %v143, %v142
  %v145 = vmul.f32 0.5, %v144
  %v146 = vsub.f32 1.5, %v145
  %v147 = vmul.f32 %v142, %v146
  %v148 = vmul.f32 %v141, %v147
  %vm149 = vcmp.eq.f32.partialorder %v141, inf
  %v150 = vsel %vm149, %v141, %v148
  %vm151 = vcmp.eq.f32.partialorder %v141, 0.0
  %v152 = vand.u32 %v141, 2147483648
  %v153 = vsel %vm151, %v152, %v150
  %v154 = vmax.f32 %v153, 1e-12
  %v155 = vrcp.pop %v154
  %v156 = vmul.f32 %v154, %v155
  %v157 = vsub.f32 1.0, %v156
  %v158 = vmul.f32 %v155, %v157
  %v159 = vadd.f32 %v155, %v158
  %vm160 = vweird.f32 %v154
  %vm161 = vweird.f32 %v155
  %vm162 = vmor %vm160, %vm161
  %v163 = vsel %vm162, %v155, %v159
  %v164 = vand.u32 2147483647, %v154
  %vm165 = vcmp.eq.f32.partialorder %v164, 8.507059e+37
  %v166 = vand.u32 %v154, 2147483648
  %v167 = vor.u32 1.1754944e-38, %v166
  %v168 = vsel %vm165, %v167, %v163
  %v169 = vmul.f32 %v133, %v168
  %v170 = vmul.f32 %v134, %v134
  %v171 = vsel %vm138, %v170, 0.0
  %172 = vadd.xlane.f32.xlu0 %v171
  %v173 = vpop.xlane.xlu0 %172
  %v174 = vrsqrt.pop %v173
  %v175 = vmul.f32 %v174, %v173
  %v176 = vmul.f32 %v175, %v174
  %v177 = vmul.f32 0.5, %v176
  %v178 = vsub.f32 1.5, %v177
  %v179 = vmul.f32 %v174, %v178
  %v180 = vmul.f32 %v173, %v179
  %vm181 = vcmp.eq.f32.partialorder %v173, inf
  %v182 = vsel %vm181, %v173, %v180
  %vm183 = vcmp.eq.f32.partialorder %v173, 0.0
  %v184 = vand.u32 %v173, 2147483648
  %v185 = vsel %vm183, %v184, %v182
  %v186 = vmax.f32 %v185, 1e-12
  %v187 = vrcp.pop %v186
  %v188 = vmul.f32 %v186, %v187
  %v189 = vsub.f32 1.0, %v188
  %v190 = vmul.f32 %v187, %v189
  %v191 = vadd.f32 %v187, %v190
  %vm192 = vweird.f32 %v186
  %vm193 = vweird.f32 %v187
  %vm194 = vmor %vm192, %vm193
  %v195 = vsel %vm194, %v187, %v191
  %v196 = vand.u32 2147483647, %v186
  %vm197 = vcmp.eq.f32.partialorder %v196, 8.507059e+37
  %v198 = vand.u32 %v186, 2147483648
  %v199 = vor.u32 1.1754944e-38, %v198
  %v200 = vsel %vm197, %v199, %v195
  %v201 = vmul.f32 %v134, %v200
  %v203 = vsel %vm138, %v169, 0
  %v206 = vsel %vm138, %v201, 0
  %208 = vmatpush.xpose.msra.mxu0 0.0
  %209 = vmatpush.xpose.msra.mxu0 0.0
  %210 = vmatpush.xpose.msra.mxu0 0.0
  %211 = vmatpush.xpose.msra.mxu0 0.0
  %212 = vmatpush.xpose.msra.mxu0 0.0
  %213 = vmatpush.xpose.msra.mxu0 0.0
  %214 = vmatpush.xpose.msra.mxu0 0.0
  %215 = vmatpush.xpose.msra.mxu0 0.0
  %216 = vmatpush.xpose.msra.mxu0 0.0
  %217 = vmatpush.xpose.msra.mxu0 0.0
  %218 = vmatpush.xpose.msra.mxu0 0.0
  %219 = vmatpush.xpose.msra.mxu0 0.0
  %220 = vmatpush.xpose.msra.mxu0 0.0
  %221 = vmatpush.xpose.msra.mxu0 0.0
  %222 = vmatpush.xpose.msra.mxu0 0.0
  %223 = vmatpush.xpose.msra.mxu0 %v206
  %224 = vmatmul.f32.gmra.mxu0 %v203
  %v225 = vpop.f32.mrf.mxu0
  %v226 = vadd.f32 0.0, %v225
  %227 = vdwg.mxu0
  %v228 = vmul.f32 %v226, 2.0
  %v229 = vlaneseq
  %v230 = vshrl.u32 %v229, 7
  %v231 = vlaneseq
  %v232 = vand.u32 %v231, 127
  %vm233 = vcmp.eq.s32.totalorder %v230, %v232
  %v234 = vsel %vm233, %v228, 0.0
  %vm235 = vcmask 64512
  %v236 = vsel %vm235, %v234, 0.0
  %237 = vadd.xlane.f32.xlu0 %v236
  %v238 = vpop.xlane.xlu0 %237
  %v239 = vmul.f32 %v228, 1.442695
  %v240 = vpow.pop %v239
  %v241 = vsel %vm235, %v240, 0.0
  %242 = vadd.xlane.f32.xlu0 %v241
  %v243 = vpop.xlane.xlu0 %242
  %v244 = vlog2.pop %v243
  %v245 = vmul.f32 %v244, 0.6931472
  %v246 = vsub.f32 %v238, %v245
  %v247 = vrot.slane %v246, 4
  %v248 = vadd.f32 %v246, %v247
  %v249 = vrot.slane %v248, 2
  %v250 = vadd.f32 %v248, %v249
  %v251 = vrot.slane %v250, 1
  %v252 = vadd.f32 %v250, %v251
  %v253 = vsub.f32 0.0, %v252
  %v254 = vmul.f32 %v135, %v135
  %v255 = vsel %vm138, %v254, 0.0
  %256 = vadd.xlane.f32.xlu0 %v255
  %v257 = vpop.xlane.xlu0 %256
  %v258 = vrsqrt.pop %v257
  %v259 = vmul.f32 %v258, %v257
  %v260 = vmul.f32 %v259, %v258
  %v261 = vmul.f32 0.5, %v260
  %v262 = vsub.f32 1.5, %v261
  %v263 = vmul.f32 %v258, %v262
  %v264 = vmul.f32 %v257, %v263
  %vm265 = vcmp.eq.f32.partialorder %v257, inf
  %v266 = vsel %vm265, %v257, %v264
  %vm267 = vcmp.eq.f32.partialorder %v257, 0.0
  %v268 = vand.u32 %v257, 2147483648
  %v269 = vsel %vm267, %v268, %v266
  %v270 = vmax.f32 %v269, 1e-12
  %v271 = vrcp.pop %v270
  %v272 = vmul.f32 %v270, %v271
  %v273 = vsub.f32 1.0, %v272
  %v274 = vmul.f32 %v271, %v273
  %v275 = vadd.f32 %v271, %v274
  %vm276 = vweird.f32 %v270
  %vm277 = vweird.f32 %v271
  %vm278 = vmor %vm276, %vm277
  %v279 = vsel %vm278, %v271, %v275
  %v280 = vand.u32 2147483647, %v270
  %vm281 = vcmp.eq.f32.partialorder %v280, 8.507059e+37
  %v282 = vand.u32 %v270, 2147483648
  %v283 = vor.u32 1.1754944e-38, %v282
  %v284 = vsel %vm281, %v283, %v279
  %v285 = vmul.f32 %v135, %v284
  %v286 = vmul.f32 %v136, %v136
  %v287 = vsel %vm138, %v286, 0.0
  %288 = vadd.xlane.f32.xlu0 %v287
  %v289 = vpop.xlane.xlu0 %288
  %v290 = vrsqrt.pop %v289
  %v291 = vmul.f32 %v290, %v289
  %v292 = vmul.f32 %v291, %v290
  %v293 = vmul.f32 0.5, %v292
  %v294 = vsub.f32 1.5, %v293
  %v295 = vmul.f32 %v290, %v294
  %v296 = vmul.f32 %v289, %v295
  %vm297 = vcmp.eq.f32.partialorder %v289, inf
  %v298 = vsel %vm297, %v289, %v296
  %vm299 = vcmp.eq.f32.partialorder %v289, 0.0
  %v300 = vand.u32 %v289, 2147483648
  %v301 = vsel %vm299, %v300, %v298
  %v302 = vmax.f32 %v301, 1e-12
  %v303 = vrcp.pop %v302
  %v304 = vmul.f32 %v302, %v303
  %v305 = vsub.f32 1.0, %v304
  %v306 = vmul.f32 %v303, %v305
  %v307 = vadd.f32 %v303, %v306
  %vm308 = vweird.f32 %v302
  %vm309 = vweird.f32 %v303
  %vm310 = vmor %vm308, %vm309
  %v311 = vsel %vm310, %v303, %v307
  %v312 = vand.u32 2147483647, %v302
  %vm313 = vcmp.eq.f32.partialorder %v312, 8.507059e+37
  %v314 = vand.u32 %v302, 2147483648
  %v315 = vor.u32 1.1754944e-38, %v314
  %v316 = vsel %vm313, %v315, %v311
  %v317 = vmul.f32 %v136, %v316
  %v319 = vsel %vm138, %v285, 0
  %v322 = vsel %vm138, %v317, 0
  %324 = vmatpush.xpose.msra.mxu0 0.0
  %325 = vmatpush.xpose.msra.mxu0 0.0
  %326 = vmatpush.xpose.msra.mxu0 0.0
  %327 = vmatpush.xpose.msra.mxu0 0.0
  %328 = vmatpush.xpose.msra.mxu0 0.0
  %329 = vmatpush.xpose.msra.mxu0 0.0
  %330 = vmatpush.xpose.msra.mxu0 0.0
  %331 = vmatpush.xpose.msra.mxu0 0.0
  %332 = vmatpush.xpose.msra.mxu0 0.0
  %333 = vmatpush.xpose.msra.mxu0 0.0
  %334 = vmatpush.xpose.msra.mxu0 0.0
  %335 = vmatpush.xpose.msra.mxu0 0.0
  %336 = vmatpush.xpose.msra.mxu0 0.0
  %337 = vmatpush.xpose.msra.mxu0 0.0
  %338 = vmatpush.xpose.msra.mxu0 0.0
  %339 = vmatpush.xpose.msra.mxu0 %v322
  %340 = vmatmul.f32.gmra.mxu0 %v319
  %v341 = vpop.f32.mrf.mxu0
  %v342 = vadd.f32 0.0, %v341
  %343 = vdwg.mxu0
  %v344 = vmul.f32 %v342, 2.0
  %v345 = vsel %vm233, %v344, 0.0
  %v346 = vsel %vm235, %v345, 0.0
  %347 = vadd.xlane.f32.xlu0 %v346
  %v348 = vpop.xlane.xlu0 %347
  %v349 = vmul.f32 %v344, 1.442695
  %v350 = vpow.pop %v349
  %v351 = vsel %vm235, %v350, 0.0
  %352 = vadd.xlane.f32.xlu0 %v351
  %v353 = vpop.xlane.xlu0 %352
  %v354 = vlog2.pop %v353
  %v355 = vmul.f32 %v354, 0.6931472
  %v356 = vsub.f32 %v348, %v355
  %v357 = vrot.slane %v356, 4
  %v358 = vadd.f32 %v356, %v357
  %v359 = vrot.slane %v358, 2
  %v360 = vadd.f32 %v358, %v359
  %v361 = vrot.slane %v360, 1
  %v362 = vadd.f32 %v360, %v361
  %v363 = vsub.f32 0.0, %v362
  %v364 = vadd.f32 %v253, %v363
  %v365 = vmul.f32 %v364, 0.5
  %vm366 = vcmp.eq.s32.totalorder %v232, 0
  %368 = vset.pattern.permute.xlu0 0
  %369 = vperm.xlu0 %368, %v132
  %v370 = vpop.permute.xlu0 %369
  %v372 = vsel %vm366, %v370, 0.0
  %vm373 = vcmp.eq.s32.totalorder %v232, 1
  %vm374 = vcmp.eq.s32.totalorder %v230, 0
  %vm375 = vmand %vm373, %vm374
  %v376 = vsel %vm375, %v365, %v372
  %377 = vst [vmem:[%s4] sm:$0xff] %v376
  // Predicated region
  $region18: #{bgcl_forward.1} parent=0 // pred_check
    _
  $region19: #{bgcl_forward.1} parent=0 // pred_check_branch
    %379 = sbr.rel (0) target = $region21
  $region20: #{bgcl_forward.1} parent=0 // pred_region
    _
  $region21: #{bgcl_forward.1} parent=0 // pred_fallthru
    _
  // Predicated region
  $region22: #{bgcl_forward.1} parent=0 // pred_check
    _
  $region23: #{bgcl_forward.1} parent=0 // pred_check_branch
    %381 = sbr.rel (0) target = $region25
  $region24: #{bgcl_forward.1} parent=0 // pred_region
    _
  $region25: #{bgcl_forward.1} parent=0 // pred_fallthru
    _

</llo_original>
